<compile_context>
chip_gen: v7x
topology: tpu7x:2x2x1
jax: 0.10.0
libtpu: 0.0.40
codegen_flags: <defaults>
</compile_context>

<pallas_src>
import math
from typing import NamedTuple

import jax
import jax.numpy as jnp
from jax import lax
from jax.experimental import pallas as pl
from jax.experimental.pallas import tpu as pltpu


_LANE = 128
_SUBLANE = 8


def _round_up(n, m):
    return ((n + m - 1) // m) * m


class CurveMLPDims(NamedTuple):
    in_dim: int
    mid_dim: int
    num_classes: int
    in_pad: int
    mid_pad: int
    cls_pad: int


def _mlp_kernel(x_ref, w1_ref, b1_ref, w2_ref, b2_ref, out_ref):
    """Fused Linear -> ReLU -> Linear on pre-blended, lane-dense weights.

    x_ref:   VMEM (tile_b, in_pad)    bf16  (batch-tiled, pipelined)
    w1_ref:  VMEM (mid_pad, in_pad)   bf16  (whole-array resident, single copy)
    b1_ref:  VMEM (1, mid_pad)        f32
    w2_ref:  VMEM (cls_pad, mid_pad)  bf16
    b2_ref:  VMEM (1, cls_pad)        f32
    out_ref: VMEM (tile_b, cls_pad)   f32
    """
    # Contract last dim of activations vs last dim of (out, in)-layout weights
    # (== x @ W.T); Mosaic feeds the MXU directly with no transpose of W.
    dn = (((1,), (1,)), ((), ()))
    h = lax.dot_general(x_ref[...], w1_ref[...], dimension_numbers=dn,
                        preferred_element_type=jnp.float32)
    h = jnp.maximum(h + b1_ref[...], 0.0).astype(jnp.bfloat16)
    out = lax.dot_general(h, w2_ref[...], dimension_numbers=dn,
                          preferred_element_type=jnp.float32)
    out_ref[...] = (out + b2_ref[...]).astype(out_ref.dtype)


def prepare_curve_params(w1, b1, w2, b2):
    """One-time prep (NOT the per-call hot path): zero-pad the bend copies to
    lane-dense shapes.  Zero padding is a mathematical no-op for this network."""
    num_bends, mid_dim, in_dim = w1.shape
    num_classes = w2.shape[1]
    assert w2.shape == (num_bends, num_classes, mid_dim)
    assert b1.shape == (num_bends, mid_dim)
    assert b2.shape == (num_bends, num_classes)

    in_pad = _round_up(in_dim, _LANE)
    mid_pad = _round_up(mid_dim, _LANE)
    cls_pad = _round_up(num_classes, _LANE)

    f32 = jnp.float32
    w1p = jnp.zeros((num_bends, mid_pad, in_pad), f32).at[:, :mid_dim, :in_dim].set(
        w1.astype(f32))
    b1p = jnp.zeros((num_bends, mid_pad), f32).at[:, :mid_dim].set(b1.astype(f32))
    w2p = jnp.zeros((num_bends, cls_pad, mid_pad), f32).at[:, :num_classes, :mid_dim].set(
        w2.astype(f32))
    b2p = jnp.zeros((num_bends, cls_pad), f32).at[:, :num_classes].set(b2.astype(f32))

    dims = CurveMLPDims(in_dim=in_dim, mid_dim=mid_dim, num_classes=num_classes,
                        in_pad=in_pad, mid_pad=mid_pad, cls_pad=cls_pad)
    return (w1p, b1p, w2p, b2p), dims


def linear_one_layer_curve(x, coeffs_t, padded_params, dims, *, tile_b=256):
    """Per-call forward: blend-once (wrapper einsum), pad x, run fused MLP kernel."""
    w1p, b1p, w2p, b2p = padded_params
    B = x.shape[0]
    x2d = x.reshape(B, -1)
    assert x2d.shape[1] == dims.in_dim, (x2d.shape, dims.in_dim)

    f32 = jnp.float32
    bf16 = jnp.bfloat16
    c = coeffs_t.astype(f32)

    # Blend-once over num_bends (tiny einsum); blend in f32, cast weights to
    # bf16 for native MXU rate.  Biases stay f32.
    w1 = jnp.einsum("k,koi->oi", c, w1p).astype(bf16)
    w2 = jnp.einsum("k,koi->oi", c, w2p).astype(bf16)
    b1 = jnp.einsum("k,ko->o", c, b1p).reshape(1, dims.mid_pad)
    b2 = jnp.einsum("k,ko->o", c, b2p).reshape(1, dims.cls_pad)

    # Pad only x per call (batch to sublane multiple, features already padded).
    b_pad = _round_up(B, _SUBLANE)
    tile_b = min(tile_b, b_pad)
    b_pad = _round_up(b_pad, tile_b)
    xp = jnp.zeros((b_pad, dims.in_pad), bf16).at[:B, :dims.in_dim].set(x2d.astype(bf16))

    n_tiles = b_pad // tile_b

    # VMEM budget: single-buffered resident weights/biases + double-buffered
    # x / out tiles, with 2x headroom (floor 16 MiB, cap 128 MiB).
    resident_bytes = (w1.size + w2.size) * 2 + (b1.size + b2.size) * 4
    streamed_bytes = 2 * tile_b * dims.in_pad * 2 + 2 * tile_b * dims.cls_pad * 4
    vmem_limit = int(min(128 * 1024 * 1024,
                         max(16 * 1024 * 1024, 2 * (resident_bytes + streamed_bytes))))

    flops = 2 * b_pad * dims.in_pad * dims.mid_pad + 2 * b_pad * dims.mid_pad * dims.cls_pad
    bytes_accessed = (xp.size * 2 + (w1.size + w2.size) * 2
                      + (b1.size + b2.size) * 4 + b_pad * dims.cls_pad * 4)
    cost = pl.CostEstimate(flops=flops, transcendentals=0, bytes_accessed=bytes_accessed)

    # Megacore: shard batch tiles across TensorCores only when there is more
    # than one tile; otherwise "parallel" would just duplicate the weight DMA
    # into each core's private VMEM on v7x.
    dim_sem = ("parallel",) if n_tiles > 1 else ("arbitrary",)

    out_padded = pl.pallas_call(
        _mlp_kernel,
        out_shape=jax.ShapeDtypeStruct((b_pad, dims.cls_pad), f32),
        grid_spec=pltpu.PrefetchScalarGridSpec(
            num_scalar_prefetch=0,
            grid=(n_tiles,),
            in_specs=[
                # Activations: tiled over the batch grid axis (pipelined).
                pl.BlockSpec((tile_b, dims.in_pad), lambda i: (i, 0)),
                # Blended weights/biases: whole-array VMEM residents -> DMA'd
                # once, single buffer, no per-tile re-fetch.
                pl.BlockSpec(memory_space=pltpu.MemorySpace.VMEM),
                pl.BlockSpec(memory_space=pltpu.MemorySpace.VMEM),
                pl.BlockSpec(memory_space=pltpu.MemorySpace.VMEM),
                pl.BlockSpec(memory_space=pltpu.MemorySpace.VMEM),
            ],
            out_specs=pl.BlockSpec((tile_b, dims.cls_pad), lambda i: (i, 0)),
        ),
        compiler_params=pltpu.CompilerParams(
            dimension_semantics=dim_sem,
            vmem_limit_bytes=vmem_limit,
        ),
        cost_estimate=cost,
    )(xp, w1, b1, w2, b2)

    return out_padded[:B, :dims.num_classes]


def _init_curve_linear(key, in_features, out_features, num_bends):
    """Deterministic init mimicking curves.Linear (uniform +/- 1/sqrt(in_features))
    with an independent copy per bend (fix point)."""
    stdv = 1.0 / math.sqrt(in_features)
    kw, kb = jax.random.split(key)
    w = jax.random.uniform(
        kw, (num_bends, out_features, in_features), jnp.float32, -stdv, stdv)
    b = jax.random.uniform(kb, (num_bends, out_features), jnp.float32, -stdv, stdv)
    return w, b


if __name__ == "__main__":
    # Small shapes consistent with the module (flattened input of in_dim features).
    batch = 8
    in_dim = 32
    middle_dim = 64
    num_classes = 10
    fix_points = (True, False, True)   # 3 bends
    num_bends = len(fix_points)

    root = jax.random.PRNGKey(0)
    k_x, k_fc1, k_fc2 = jax.random.split(root, 3)

    x = jax.random.normal(k_x, (batch, in_dim), jnp.float32)

    # Bezier-style curve coefficients at t = 0.5 for 3 bends: (1-t)^2, 2t(1-t), t^2
    t = 0.5
    coeffs_t = jnp.array([(1 - t) ** 2, 2 * t * (1 - t), t ** 2], jnp.float32)

    w1, b1 = _init_curve_linear(k_fc1, in_dim, middle_dim, num_bends)
    w2, b2 = _init_curve_linear(k_fc2, middle_dim, num_classes, num_bends)

    # One-time padding of the bend copies (outside the per-call hot path).
    padded_params, dims = prepare_curve_params(w1, b1, w2, b2)

    # Jit the per-call forward (dims are static Python ints).
    forward = jax.jit(linear_one_layer_curve, static_argnums=(3,))
    out = jax.block_until_ready(forward(x, coeffs_t, padded_params, dims))

    # Pure-JAX f32 reference of the module semantics.
    W1 = jnp.einsum("k,koi->oi", coeffs_t, w1)
    B1 = jnp.einsum("k,ko->o", coeffs_t, b1)
    W2 = jnp.einsum("k,koi->oi", coeffs_t, w2)
    B2 = jnp.einsum("k,ko->o", coeffs_t, b2)
    h_ref = jnp.maximum(x @ W1.T + B1, 0.0)
    out_ref = h_ref @ W2.T + B2

    assert out.shape == (batch, num_classes)
    max_err = float(jnp.max(jnp.abs(out - out_ref)))
    # bf16 matmul operands (f32 accumulation) -> looser tolerance than pure f32.
    assert jnp.allclose(out, out_ref, atol=3e-2, rtol=3e-2), max_err

    print("KERNEL_OK")
</pallas_src>

<mosaic_0001>
module attributes {stable_mosaic.version = 11 : i64} {
  func.func @_mlp_kernel(%arg0: i32, %arg1: memref<8x128xbf16, #tpu.memory_space<vmem>>, %arg2: memref<128x128xbf16, #tpu.memory_space<vmem>>, %arg3: memref<1x128xf32, #tpu.memory_space<vmem>>, %arg4: memref<128x128xbf16, #tpu.memory_space<vmem>>, %arg5: memref<1x128xf32, #tpu.memory_space<vmem>>, %arg6: memref<8x128xf32, #tpu.memory_space<vmem>>) attributes {dimension_semantics = [#tpu.dimension_semantics<arbitrary>], iteration_bounds = array<i64: 1>, scalar_prefetch = 0 : i64, scratch_operands = 0 : i64, tpu.core_type = #tpu.core_type<tc>, window_params = [{transform_indices = @transform_0, window_bounds = array<i64: 8, 128>}, {pipeline_mode = #tpu.pipeline_mode<synchronous>, transform_indices = @transform_1, window_bounds = array<i64: 128, 128>}, {pipeline_mode = #tpu.pipeline_mode<synchronous>, transform_indices = @transform_2, window_bounds = array<i64: 1, 128>}, {pipeline_mode = #tpu.pipeline_mode<synchronous>, transform_indices = @transform_3, window_bounds = array<i64: 128, 128>}, {pipeline_mode = #tpu.pipeline_mode<synchronous>, transform_indices = @transform_4, window_bounds = array<i64: 1, 128>}, {transform_indices = @transform_5, window_bounds = array<i64: 8, 128>}]} {
    %c0 = arith.constant 0 : index
    %c0_0 = arith.constant 0 : index
    %0 = vector.load %arg1[%c0, %c0_0] : memref<8x128xbf16, #tpu.memory_space<vmem>>, vector<8x128xbf16>
    %c0_1 = arith.constant 0 : index
    %c0_2 = arith.constant 0 : index
    %1 = vector.load %arg2[%c0_1, %c0_2] : memref<128x128xbf16, #tpu.memory_space<vmem>>, vector<128x128xbf16>
    %cst = arith.constant dense<0.000000e+00> : vector<8x128xf32>
    %2 = tpu.matmul %0, %1, %cst {dimension_numbers = #tpu.dot_dimension_numbers<[1], [1], [0], [0], [0, 0, 1, 0], [], []>} : vector<8x128xbf16>, vector<128x128xbf16>, vector<8x128xf32> -> vector<8x128xf32>
    %c0_3 = arith.constant 0 : index
    %c0_4 = arith.constant 0 : index
    %3 = vector.load %arg3[%c0_3, %c0_4] : memref<1x128xf32, #tpu.memory_space<vmem>>, vector<1x128xf32>
    %4 = vector.broadcast %3 : vector<1x128xf32> to vector<8x128xf32>
    %5 = arith.addf %2, %4 : vector<8x128xf32>
    %cst_5 = arith.constant 0.000000e+00 : f32
    %6 = vector.broadcast %cst_5 : f32 to vector<8x128xf32>
    %7 = arith.maximumf %5, %6 : vector<8x128xf32>
    %8 = arith.truncf %7 : vector<8x128xf32> to vector<8x128xbf16>
    %c0_6 = arith.constant 0 : index
    %c0_7 = arith.constant 0 : index
    %9 = vector.load %arg4[%c0_6, %c0_7] : memref<128x128xbf16, #tpu.memory_space<vmem>>, vector<128x128xbf16>
    %cst_8 = arith.constant dense<0.000000e+00> : vector<8x128xf32>
    %10 = tpu.matmul %8, %9, %cst_8 {dimension_numbers = #tpu.dot_dimension_numbers<[1], [1], [0], [0], [0, 0, 1, 0], [], []>} : vector<8x128xbf16>, vector<128x128xbf16>, vector<8x128xf32> -> vector<8x128xf32>
    %c0_9 = arith.constant 0 : index
    %c0_10 = arith.constant 0 : index
    %11 = vector.load %arg5[%c0_9, %c0_10] : memref<1x128xf32, #tpu.memory_space<vmem>>, vector<1x128xf32>
    %12 = vector.broadcast %11 : vector<1x128xf32> to vector<8x128xf32>
    %13 = arith.addf %10, %12 : vector<8x128xf32>
    %c0_11 = arith.constant 0 : index
    %c0_12 = arith.constant 0 : index
    %14 = vector.load %arg6[%c0_11, %c0_12] : memref<8x128xf32, #tpu.memory_space<vmem>>, vector<8x128xf32>
    tpu.vector_store %arg6[%c0_11, %c0_12], %13 {strides = array<i32>} : memref<8x128xf32, #tpu.memory_space<vmem>>, vector<8x128xf32>,
    return
  }
  func.func @transform_0(%arg0: i32) -> (i32, i32) {
    %c0_i32 = arith.constant 0 : i32
    %c0_i32_0 = arith.constant 0 : i32
    return %arg0, %c0_i32 : i32, i32
  }
  func.func @transform_1(%arg0: i32) -> (i32, i32) {
    %c0_i32 = arith.constant 0 : i32
    %c0_i32_0 = arith.constant 0 : i32
    %c0_i32_1 = arith.constant 0 : i32
    return %c0_i32, %c0_i32_0 : i32, i32
  }
  func.func @transform_2(%arg0: i32) -> (i32, i32) {
    %c0_i32 = arith.constant 0 : i32
    %c0_i32_0 = arith.constant 0 : i32
    %c0_i32_1 = arith.constant 0 : i32
    return %c0_i32, %c0_i32_0 : i32, i32
  }
  func.func @transform_3(%arg0: i32) -> (i32, i32) {
    %c0_i32 = arith.constant 0 : i32
    %c0_i32_0 = arith.constant 0 : i32
    %c0_i32_1 = arith.constant 0 : i32
    return %c0_i32, %c0_i32_0 : i32, i32
  }
  func.func @transform_4(%arg0: i32) -> (i32, i32) {
    %c0_i32 = arith.constant 0 : i32
    %c0_i32_0 = arith.constant 0 : i32
    %c0_i32_1 = arith.constant 0 : i32
    return %c0_i32, %c0_i32_0 : i32, i32
  }
  func.func @transform_5(%arg0: i32) -> (i32, i32) {
    %c0_i32 = arith.constant 0 : i32
    %c0_i32_0 = arith.constant 0 : i32
    return %arg0, %c0_i32 : i32, i32
  }
}

</mosaic_0001>

<llo_original>
// kernel: linear_one_layer_curve.1
$region0: #{linear_one_layer_curve.1}
  #allocation0 [shape = 'u32[]', space=smem, size = 0x4, offset = 0x4, fixed_abs, tag = 'smem constant byte address 0x4 - core index']
  #allocation1 [shape = 'u32[144,128]{1,0:T(1,128)}', space=vmem, size = 0x12000, scoped, tag = 'internal scratch']
  %s0 = inlined_call_operand.vmem [shape: bf16[8,128], index: 0, kind: input, shape index: {}]
  %s1 = inlined_call_operand.vmem [shape: bf16[128,128], index: 1, kind: input, shape index: {}]
  %s2 = inlined_call_operand.vmem [shape: f32[1,128], index: 2, kind: input, shape index: {}]
  %s3 = inlined_call_operand.vmem [shape: bf16[128,128], index: 3, kind: input, shape index: {}]
  %s4 = inlined_call_operand.vmem [shape: f32[1,128], index: 4, kind: input, shape index: {}]
  %s5 = inlined_call_operand.hbm [shape: f32[8,128], index: 5, kind: output, shape index: {}]
  %s6 = sld [smem:[#allocation0]]
  $region30: #{linear_one_layer_curve.1} parent=0
    _
  %s8 = ssub.s32 1, %s6
  %s9 = scalar_select 0, %s8, %s6
  $region1: #{linear_one_layer_curve.1} parent=0
    #allocation2 [shape = 'u8[4096]{0}', space=vmem, size = 0x1000, scoped, tag = 'output window, operand 0, single buffered']
    #allocation3 [shape = 's32[1]{0}', space=sflag, size = 0x4, scoped, tag = 'scoped memory for linear_one_layer_curve.1']
    %10 = vsyncpa [#allocation3], 0
    // Predicated region
    $region2: #{linear_one_layer_curve.1} parent=1 // pred_check
      _
    $region3: #{linear_one_layer_curve.1} parent=1 // pred_check_branch
      %12 = sbr.rel (0) target = $region5
    $region4: #{linear_one_layer_curve.1} parent=1 // pred_region
      _
    $region5: #{linear_one_layer_curve.1} parent=1 // pred_fallthru
      _
    // Predicated region
    $region6: #{linear_one_layer_curve.1} parent=1 // pred_check
      _
    $region7: #{linear_one_layer_curve.1} parent=1 // pred_check_branch
      %14 = sbr.rel (0) target = $region9
    $region8: #{linear_one_layer_curve.1} parent=1 // pred_region
      _
    $region9: #{linear_one_layer_curve.1} parent=1 // pred_fallthru
      _
    // Predicated region
    $region10: #{linear_one_layer_curve.1} parent=1 // pred_check
      _
    $region11: #{linear_one_layer_curve.1} parent=1 // pred_check_branch
      %16 = sbr.rel (0) target = $region13
    $region12: #{linear_one_layer_curve.1} parent=1 // pred_region
      _
    $region13: #{linear_one_layer_curve.1} parent=1 // pred_fallthru
      _
    // Predicated region
    $region14: #{linear_one_layer_curve.1} parent=1 // pred_check
      _
    $region15: #{linear_one_layer_curve.1} parent=1 // pred_check_branch
      %18 = sbr.rel (0) target = $region17
    $region16: #{linear_one_layer_curve.1} parent=1 // pred_region
      _
    $region17: #{linear_one_layer_curve.1} parent=1 // pred_fallthru
      _
    // Predicated region
    $region18: #{linear_one_layer_curve.1} parent=1 // pred_check
      _
    $region19: #{linear_one_layer_curve.1} parent=1 // pred_check_branch
      %20 = sbr.rel (0) target = $region21
    $region20: #{linear_one_layer_curve.1} parent=1 // pred_region
      _
    $region21: #{linear_one_layer_curve.1} parent=1 // pred_fallthru
      _
    %v22 = vld [vmem:[%s0] sm:$0xf]
    %v23 = vld [vmem:[%s1] sm:$0xf]
    %v24 = vld [vmem:[%s1 + $0x4] sm:$0xf]
    %v25 = vld [vmem:[%s1 + $0x8] sm:$0xf]
    %v26 = vld [vmem:[%s1 + $0xc] sm:$0xf]
    %v27 = vld [vmem:[%s1 + $0x10] sm:$0xf]
    %v28 = vld [vmem:[%s1 + $0x14] sm:$0xf]
    %v29 = vld [vmem:[%s1 + $0x18] sm:$0xf]
    %v30 = vld [vmem:[%s1 + $0x1c] sm:$0xf]
    %v31 = vld [vmem:[%s1 + $0x20] sm:$0xf]
    %v32 = vld [vmem:[%s1 + $0x24] sm:$0xf]
    %v33 = vld [vmem:[%s1 + $0x28] sm:$0xf]
    %v34 = vld [vmem:[%s1 + $0x2c] sm:$0xf]
    %v35 = vld [vmem:[%s1 + $0x30] sm:$0xf]
    %v36 = vld [vmem:[%s1 + $0x34] sm:$0xf]
    %v37 = vld [vmem:[%s1 + $0x38] sm:$0xf]
    %v38 = vld [vmem:[%s1 + $0x3c] sm:$0xf]
    %v39 = vld [vmem:[%s2] sm:$0x1]
    %v41 = vlaneseq
    %v42 = vshrl.u32 %v41, 7
    %v43 = vsub.s32 0, %v42
    %v44 = vrot.slane %v39, %v43
    %v62 = vunpack.c.l.b16 %v23
    %v63 = vunpack.c.l.b16 %v24
    %v64 = vunpack.c.l.b16 %v25
    %v65 = vunpack.c.l.b16 %v26
    %v66 = vunpack.c.l.b16 %v27
    %v67 = vunpack.c.l.b16 %v28
    %v68 = vunpack.c.l.b16 %v29
    %v69 = vunpack.c.l.b16 %v30
    %v70 = vunpack.c.l.b16 %v31
    %v71 = vunpack.c.l.b16 %v32
    %v72 = vunpack.c.l.b16 %v33
    %v73 = vunpack.c.l.b16 %v34
    %v74 = vunpack.c.l.b16 %v35
    %v75 = vunpack.c.l.b16 %v36
    %v76 = vunpack.c.l.b16 %v37
    %v77 = vunpack.c.l.b16 %v38
    %v78 = vpack.c.b16 %v63, %v62
    %v79 = vpack.c.b16 %v65, %v64
    %v80 = vpack.c.b16 %v67, %v66
    %v81 = vpack.c.b16 %v69, %v68
    %v82 = vpack.c.b16 %v71, %v70
    %v83 = vpack.c.b16 %v73, %v72
    %v84 = vpack.c.b16 %v75, %v74
    %v85 = vpack.c.b16 %v77, %v76
    %94 = vmatprep.subr.bf16.mxu0 0
    %95 = vmatpush1.bf16.xpose.msra.mxu0 %v78
    %96 = vmatprep.subr.bf16.mxu0 0
    %97 = vmatpush1.bf16.xpose.msra.mxu0 %v79
    %98 = vmatprep.subr.bf16.mxu0 0
    %99 = vmatpush1.bf16.xpose.msra.mxu0 %v80
    %100 = vmatprep.subr.bf16.mxu0 0
    %101 = vmatpush1.bf16.xpose.msra.mxu0 %v81
    %102 = vmatprep.subr.bf16.mxu0 0
    %103 = vmatpush1.bf16.xpose.msra.mxu0 %v82
    %104 = vmatprep.subr.bf16.mxu0 0
    %105 = vmatpush1.bf16.xpose.msra.mxu0 %v83
    %106 = vmatprep.subr.bf16.mxu0 0
    %107 = vmatpush1.bf16.xpose.msra.mxu0 %v84
    %108 = vmatprep.subr.bf16.mxu0 0
    %109 = vmatpush1.bf16.xpose.msra.mxu0 %v85
    %110 = vmatprep.subr.bf16.mxu0 0
    %111 = vmatpush1.bf16.xpose.msra.mxu0 0
    %112 = vmatprep.subr.bf16.mxu0 0
    %113 = vmatpush1.bf16.xpose.msra.mxu0 0
    %114 = vmatprep.subr.bf16.mxu0 0
    %115 = vmatpush1.bf16.xpose.msra.mxu0 0
    %116 = vmatprep.subr.bf16.mxu0 0
    %117 = vmatpush1.bf16.xpose.msra.mxu0 0
    %118 = vmatprep.subr.bf16.mxu0 0
    %119 = vmatpush1.bf16.xpose.msra.mxu0 0
    %120 = vmatprep.subr.bf16.mxu0 0
    %121 = vmatpush1.bf16.xpose.msra.mxu0 0
    %122 = vmatprep.subr.bf16.mxu0 0
    %123 = vmatpush1.bf16.xpose.msra.mxu0 0
    %124 = vmatprep.subr.bf16.mxu0 0
    %125 = vmatpush1.bf16.xpose.msra.mxu0 0
    %126 = vmatprep.mubr.bf16.mxu0 0
    %127 = vmatmul.mubr.bf16.gmra.mrb[0].mxu0 %v22
    %v128 = vpop.f32.mrb[0].mxu0
    %v129 = vadd.f32 %v44, %v128
    %v130 = vpop.f32.mrb[0].mxu0
    %v131 = vpop.f32.mrb[0].mxu0
    %v132 = vpop.f32.mrb[0].mxu0
    %133 = vdwg.mxu0
    %v134 = vmax.f32 %v129, 0.0
    %v135 = vpack.c.bf16 %v134, %v134
    %v136 = vld [vmem:[%s3] sm:$0xf]
    %v137 = vld [vmem:[%s3 + $0x4] sm:$0xf]
    %v138 = vld [vmem:[%s3 + $0x8] sm:$0xf]
    %v139 = vld [vmem:[%s3 + $0xc] sm:$0xf]
    %v140 = vld [vmem:[%s3 + $0x10] sm:$0xf]
    %v141 = vld [vmem:[%s3 + $0x14] sm:$0xf]
    %v142 = vld [vmem:[%s3 + $0x18] sm:$0xf]
    %v143 = vld [vmem:[%s3 + $0x1c] sm:$0xf]
    %v144 = vld [vmem:[%s3 + $0x20] sm:$0xf]
    %v145 = vld [vmem:[%s3 + $0x24] sm:$0xf]
    %v146 = vld [vmem:[%s3 + $0x28] sm:$0xf]
    %v147 = vld [vmem:[%s3 + $0x2c] sm:$0xf]
    %v148 = vld [vmem:[%s3 + $0x30] sm:$0xf]
    %v149 = vld [vmem:[%s3 + $0x34] sm:$0xf]
    %v150 = vld [vmem:[%s3 + $0x38] sm:$0xf]
    %v151 = vld [vmem:[%s3 + $0x3c] sm:$0xf]
    %v152 = vld [vmem:[%s4] sm:$0x1]
    %v154 = vlaneseq
    %v155 = vshrl.u32 %v154, 7
    %v156 = vsub.s32 0, %v155
    %v157 = vrot.slane %v152, %v156
    %v175 = vunpack.c.l.b16 %v136
    %v176 = vunpack.c.l.b16 %v137
    %v177 = vunpack.c.l.b16 %v138
    %v178 = vunpack.c.l.b16 %v139
    %v179 = vunpack.c.l.b16 %v140
    %v180 = vunpack.c.l.b16 %v141
    %v181 = vunpack.c.l.b16 %v142
    %v182 = vunpack.c.l.b16 %v143
    %v183 = vunpack.c.l.b16 %v144
    %v184 = vunpack.c.l.b16 %v145
    %v185 = vunpack.c.l.b16 %v146
    %v186 = vunpack.c.l.b16 %v147
    %v187 = vunpack.c.l.b16 %v148
    %v188 = vunpack.c.l.b16 %v149
    %v189 = vunpack.c.l.b16 %v150
    %v190 = vunpack.c.l.b16 %v151
    %v191 = vpack.c.b16 %v176, %v175
    %v192 = vpack.c.b16 %v178, %v177
    %v193 = vpack.c.b16 %v180, %v179
    %v194 = vpack.c.b16 %v182, %v181
    %v195 = vpack.c.b16 %v184, %v183
    %v196 = vpack.c.b16 %v186, %v185
    %v197 = vpack.c.b16 %v188, %v187
    %v198 = vpack.c.b16 %v190, %v189
    %207 = vmatprep.subr.bf16.mxu0 0
    %208 = vmatpush1.bf16.xpose.msra.mxu0 %v191
    %209 = vmatprep.subr.bf16.mxu0 0
    %210 = vmatpush1.bf16.xpose.msra.mxu0 %v192
    %211 = vmatprep.subr.bf16.mxu0 0
    %212 = vmatpush1.bf16.xpose.msra.mxu0 %v193
    %213 = vmatprep.subr.bf16.mxu0 0
    %214 = vmatpush1.bf16.xpose.msra.mxu0 %v194
    %215 = vmatprep.subr.bf16.mxu0 0
    %216 = vmatpush1.bf16.xpose.msra.mxu0 %v195
    %217 = vmatprep.subr.bf16.mxu0 0
    %218 = vmatpush1.bf16.xpose.msra.mxu0 %v196
    %219 = vmatprep.subr.bf16.mxu0 0
    %220 = vmatpush1.bf16.xpose.msra.mxu0 %v197
    %221 = vmatprep.subr.bf16.mxu0 0
    %222 = vmatpush1.bf16.xpose.msra.mxu0 %v198
    %223 = vmatprep.subr.bf16.mxu0 0
    %224 = vmatpush1.bf16.xpose.msra.mxu0 0
    %225 = vmatprep.subr.bf16.mxu0 0
    %226 = vmatpush1.bf16.xpose.msra.mxu0 0
    %227 = vmatprep.subr.bf16.mxu0 0
    %228 = vmatpush1.bf16.xpose.msra.mxu0 0
    %229 = vmatprep.subr.bf16.mxu0 0
    %230 = vmatpush1.bf16.xpose.msra.mxu0 0
    %231 = vmatprep.subr.bf16.mxu0 0
    %232 = vmatpush1.bf16.xpose.msra.mxu0 0
    %233 = vmatprep.subr.bf16.mxu0 0
    %234 = vmatpush1.bf16.xpose.msra.mxu0 0
    %235 = vmatprep.subr.bf16.mxu0 0
    %236 = vmatpush1.bf16.xpose.msra.mxu0 0
    %237 = vmatprep.subr.bf16.mxu0 0
    %238 = vmatpush1.bf16.xpose.msra.mxu0 0
    %239 = vmatprep.mubr.bf16.mxu0 0
    %240 = vmatmul.mubr.bf16.gmra.mrb[0].mxu0 %v135
    %v241 = vpop.f32.mrb[0].mxu0
    %v242 = vadd.f32 %v157, %v241
    %v243 = vpop.f32.mrb[0].mxu0
    %v244 = vpop.f32.mrb[0].mxu0
    %v245 = vpop.f32.mrb[0].mxu0
    %246 = vdwg.mxu0
    %247 = vst [vmem:[#allocation2] sm:$0xff] %v242
    // Predicated region
    $region22: #{linear_one_layer_curve.1} parent=1 // pred_check
      _
    $region23: #{linear_one_layer_curve.1} parent=1 // pred_check_branch
      %249 = sbr.rel (0) target = $region25
    $region24: #{linear_one_layer_curve.1} parent=1 // pred_region
      %s251 = ssub.s32 128, 128
      %252 = vsyncadd [#allocation3], %s251
      %s254 = sshll.u32 [#allocation2], 4
      %s255 = int_to_ptr.vmem [resolvable:$true] %s254
      %257 = dma.vmem_to_hbm [thread:$0]  %s255, 128, %s5, [#allocation3]
    $region25: #{linear_one_layer_curve.1} parent=1 // pred_fallthru
      _
    // Predicated region
    $region26: #{linear_one_layer_curve.1} parent=1 // pred_check
      _
    $region27: #{linear_one_layer_curve.1} parent=1 // pred_check_branch
      %259 = sbr.rel (0) target = $region29
    $region28: #{linear_one_layer_curve.1} parent=1 // pred_region
      %260 = dma.done [#allocation3], 128
    $region29: #{linear_one_layer_curve.1} parent=1 // pred_fallthru
      _
    %261 = vsyncpa [#allocation3], 1

</llo_original>
